<compile_context>
chip_gen: v7x
topology: tpu7x:2x2x1
jax: 0.10.0
libtpu: 0.0.40
codegen_flags: <defaults>
</compile_context>

<pallas_src>
import jax
import jax.numpy as jnp
from jax.experimental import pallas as pl
from jax.experimental.pallas import tpu as pltpu


def _round_up(x: int, m: int) -> int:
    return (x + m - 1) // m * m


def _pick_tile(padded: int, target: int) -> int:
    """Largest multiple of 128 that divides `padded` and is <= target.

    `padded` is already a multiple of 128.  If the whole axis fits in one tile
    (padded <= target) the full extent is used (single block on that axis).
    """
    if padded <= target:
        return padded
    units = padded // 128
    max_units = max(1, target // 128)
    best = 1
    for d in range(1, max_units + 1):
        if units % d == 0:
            best = d
    return best * 128


def _gram_sigmoid_fused_kernel(i_map_ref, j_map_ref, lhs_ref, rhsT_ref, o_ref):
    """Single k-step path: whole contraction fits one tile, no accumulator."""
    del i_map_ref, j_map_ref
    x = jnp.dot(lhs_ref[...], rhsT_ref[...], preferred_element_type=jnp.float32)
    o_ref[...] = jax.nn.sigmoid(x).astype(o_ref.dtype)


def _gram_sigmoid_acc_kernel(i_map_ref, j_map_ref, lhs_ref, rhsT_ref, o_ref, acc_ref):
    """Multi k-step path: f32 VMEM accumulator, sigmoid epilogue at last k."""
    del i_map_ref, j_map_ref
    k = pl.program_id(1)

    @pl.when(k == 0)
    def _():
        acc_ref[...] = jnp.zeros_like(acc_ref)

    acc_ref[...] += jnp.dot(
        lhs_ref[...], rhsT_ref[...], preferred_element_type=jnp.float32
    )

    @pl.when(k == pl.num_programs(1) - 1)
    def _():
        o_ref[...] = jax.nn.sigmoid(acc_ref[...]).astype(o_ref.dtype)


def dot_product_predictor(
    h: jax.Array,
    dropout: float = 0.0,
    *,
    tmn_target: int = 512,      # output tile (square, N x N Gram) target size
    tk_target: int = 2048,      # contraction tile target (collapse k if D fits)
    compute_dtype=jnp.bfloat16,  # None / jnp.float32 for the full-precision path
) -> jax.Array:
    """Pallas implementation of DotProductPredictor.forward (inference, p=0)."""
    assert h.ndim == 2, "DotProductPredictor expects a 2-D input (N, D)"
    if dropout != 0.0:
        # TODO(synk): implement dropout via pltpu.prng_seed / prng_random_bits.
        raise NotImplementedError("dropout > 0 is not implemented in this kernel")

    n, d = h.shape
    out_dtype = h.dtype

    if compute_dtype is not None:
        h = h.astype(compute_dtype)

    # Pad only to 128-lane multiples (lane-dense output, exact zero-padding of
    # the contraction), then pick tiles that divide the padded sizes.
    n_pad = _round_up(n, 128)
    d_pad = _round_up(d, 128)
    tmn = _pick_tile(n_pad, max(128, _round_up(tmn_target, 128)))
    tk = _pick_tile(d_pad, max(128, _round_up(tk_target, 128)))

    if (n_pad, d_pad) != (n, d):
        h_p = jnp.zeros((n_pad, d_pad), h.dtype).at[:n, :d].set(h)
    else:
        h_p = h
    # Materialize h.T once in HBM so the kernel is a plain NN matmul
    # (no per-step XLU transpose of the rhs tile).
    h_t = h_p.T

    nb = n_pad // tmn
    kb = d_pad // tk

    # Flat grid over block-upper-triangular (i, j) tile pairs, j >= i.
    pairs = [(i, j) for i in range(nb) for j in range(i, nb)]
    num_pairs = len(pairs)
    i_map = jnp.asarray([p[0] for p in pairs], dtype=jnp.int32)
    j_map = jnp.asarray([p[1] for p in pairs], dtype=jnp.int32)

    grid = (num_pairs, kb)

    in_itemsize = jnp.dtype(h_p.dtype).itemsize
    out_itemsize = jnp.dtype(out_dtype).itemsize
    cost = pl.CostEstimate(
        flops=2 * num_pairs * tmn * tmn * d_pad,
        transcendentals=num_pairs * tmn * tmn,
        bytes_accessed=2 * num_pairs * tmn * d_pad * in_itemsize
        + num_pairs * tmn * tmn * out_itemsize,
    )

    if kb == 1:
        kernel = _gram_sigmoid_fused_kernel
        scratch_shapes = []
        acc_bytes = 0
    else:
        kernel = _gram_sigmoid_acc_kernel
        scratch_shapes = [pltpu.VMEM((tmn, tmn), jnp.float32)]
        acc_bytes = tmn * tmn * 4

    # Double-buffered operand tiles + double-buffered output tile (+ f32 acc).
    vmem_needed = (
        2 * 2 * tmn * tk * in_itemsize + 2 * tmn * tmn * out_itemsize + acc_bytes
    )
    vmem_limit = min(100 << 20, max(32 << 20, int(vmem_needed * 1.5) + (2 << 20)))

    out = pl.pallas_call(
        kernel,
        out_shape=jax.ShapeDtypeStruct((n_pad, n_pad), out_dtype),
        grid_spec=pltpu.PrefetchScalarGridSpec(
            num_scalar_prefetch=2,
            grid=grid,
            in_specs=[
                # lhs rows:  (tmn, tk) tile of h at block (i_map[t], k)
                pl.BlockSpec((tmn, tk), lambda t, k, im, jm: (im[t], k)),
                # rhs cols:  (tk, tmn) tile of h.T at block (k, j_map[t])
                pl.BlockSpec((tk, tmn), lambda t, k, im, jm: (k, jm[t])),
            ],
            out_specs=pl.BlockSpec((tmn, tmn), lambda t, k, im, jm: (im[t], jm[t])),
            scratch_shapes=scratch_shapes,
        ),
        compiler_params=pltpu.CompilerParams(
            dimension_semantics=("parallel", "arbitrary"),
            vmem_limit_bytes=vmem_limit,
        ),
        cost_estimate=cost,
    )(i_map, j_map, h_p, h_t)

    # Only block-upper-triangular tiles were written (lower tiles hold garbage).
    # sigmoid(h @ h.T) is symmetric and tm == tn, so every element (r, c) with
    # r <= c lies in a computed tile; mirror it into the lower triangle.
    out = jnp.triu(out) + jnp.triu(out, k=1).T

    if n_pad != n:
        out = out[:n, :n]
    return out


if __name__ == "__main__":
    key = jax.random.PRNGKey(0)

    # Small shape consistent with the module's forward: h is (N, D) = (8, 32).
    h = jax.random.normal(key, (8, 32), dtype=jnp.float32)
    out = jax.block_until_ready(dot_product_predictor(h, compute_dtype=jnp.float32))
    ref = jax.nn.sigmoid(
        jnp.dot(h, h.T, precision=jax.lax.Precision.HIGHEST)
    )
    assert out.shape == (8, 8)
    assert jnp.allclose(out, ref, atol=1e-5), float(jnp.max(jnp.abs(out - ref)))

    # Padding + symmetry + mirror path (N, D not 128-aligned), full-precision.
    h2 = jax.random.normal(jax.random.PRNGKey(1), (300, 200), dtype=jnp.float32)
    out2 = jax.block_until_ready(dot_product_predictor(h2, compute_dtype=jnp.float32))
    ref2 = jax.nn.sigmoid(
        jnp.dot(h2, h2.T, precision=jax.lax.Precision.HIGHEST)
    )
    assert out2.shape == (300, 300)
    assert jnp.allclose(out2, ref2, atol=1e-4), float(jnp.max(jnp.abs(out2 - ref2)))

    # Default bf16-operand fast path, checked against a bf16-operand reference
    # with f32 accumulation (same numerics, different tiling/order).
    out3 = jax.block_until_ready(dot_product_predictor(h2))
    h2b = h2.astype(jnp.bfloat16)
    ref3 = jax.nn.sigmoid(
        jnp.dot(h2b, h2b.T, preferred_element_type=jnp.float32)
    )
    assert out3.shape == (300, 300)
    assert jnp.allclose(out3, ref3, atol=2e-3), float(jnp.max(jnp.abs(out3 - ref3)))

    print("KERNEL_OK")
</pallas_src>

<mosaic_0001>
module attributes {stable_mosaic.version = 11 : i64} {
  func.func @_gram_sigmoid_fused_kernel(%arg0: i32, %arg1: i32, %arg2: memref<1xi32, #tpu.memory_space<smem>>, %arg3: memref<1xi32, #tpu.memory_space<smem>>, %arg4: memref<128x128xf32, #tpu.memory_space<vmem>>, %arg5: memref<128x128xf32, #tpu.memory_space<vmem>>, %arg6: memref<128x128xf32, #tpu.memory_space<vmem>>) attributes {dimension_semantics = [#tpu.dimension_semantics<parallel>, #tpu.dimension_semantics<arbitrary>], iteration_bounds = array<i64: 1, 1>, scalar_prefetch = 2 : i64, scratch_operands = 0 : i64, tpu.core_type = #tpu.core_type<tc>, window_params = [{transform_indices = @transform_0, window_bounds = array<i64: 128, 128>}, {transform_indices = @transform_1, window_bounds = array<i64: 128, 128>}, {transform_indices = @transform_2, window_bounds = array<i64: 128, 128>}]} {
    %c0 = arith.constant 0 : index
    %c0_0 = arith.constant 0 : index
    %0 = vector.load %arg4[%c0, %c0_0] : memref<128x128xf32, #tpu.memory_space<vmem>>, vector<128x128xf32>
    %c0_1 = arith.constant 0 : index
    %c0_2 = arith.constant 0 : index
    %1 = vector.load %arg5[%c0_1, %c0_2] : memref<128x128xf32, #tpu.memory_space<vmem>>, vector<128x128xf32>
    %cst = arith.constant dense<0.000000e+00> : vector<128x128xf32>
    %2 = tpu.matmul %0, %1, %cst {dimension_numbers = #tpu.dot_dimension_numbers<[1], [0], [0], [1], [0, 0, 1, 1], [], []>} : vector<128x128xf32>, vector<128x128xf32>, vector<128x128xf32> -> vector<128x128xf32>
    %3 = arith.negf %2 : vector<128x128xf32>
    %4 = math.exp %3 : vector<128x128xf32>
    %cst_3 = arith.constant 1.000000e+00 : f32
    %5 = vector.broadcast %cst_3 : f32 to vector<128x128xf32>
    %6 = arith.addf %5, %4 : vector<128x128xf32>
    %7 = arith.divf %5, %6 : vector<128x128xf32>
    %c0_4 = arith.constant 0 : index
    %c0_5 = arith.constant 0 : index
    %8 = vector.load %arg6[%c0_4, %c0_5] : memref<128x128xf32, #tpu.memory_space<vmem>>, vector<128x128xf32>
    tpu.vector_store %arg6[%c0_4, %c0_5], %7 {strides = array<i32>} : memref<128x128xf32, #tpu.memory_space<vmem>>, vector<128x128xf32>,
    return
  }
  func.func @transform_0(%arg0: i32, %arg1: i32, %arg2: memref<1xi32, #tpu.memory_space<smem>>, %arg3: memref<1xi32, #tpu.memory_space<smem>>) -> (i32, i32) {
    %0 = arith.index_cast %arg0 : i32 to index
    %1 = memref.load %arg2[%0] : memref<1xi32, #tpu.memory_space<smem>>
    %c0_i32 = arith.constant 0 : i32
    return %1, %arg1 : i32, i32
  }
  func.func @transform_1(%arg0: i32, %arg1: i32, %arg2: memref<1xi32, #tpu.memory_space<smem>>, %arg3: memref<1xi32, #tpu.memory_space<smem>>) -> (i32, i32) {
    %0 = arith.index_cast %arg0 : i32 to index
    %1 = memref.load %arg3[%0] : memref<1xi32, #tpu.memory_space<smem>>
    %c0_i32 = arith.constant 0 : i32
    return %arg1, %1 : i32, i32
  }
  func.func @transform_2(%arg0: i32, %arg1: i32, %arg2: memref<1xi32, #tpu.memory_space<smem>>, %arg3: memref<1xi32, #tpu.memory_space<smem>>) -> (i32, i32) {
    %0 = arith.index_cast %arg0 : i32 to index
    %1 = memref.load %arg2[%0] : memref<1xi32, #tpu.memory_space<smem>>
    %2 = arith.index_cast %arg0 : i32 to index
    %3 = memref.load %arg3[%2] : memref<1xi32, #tpu.memory_space<smem>>
    %c0_i32 = arith.constant 0 : i32
    return %1, %3 : i32, i32
  }
}

</mosaic_0001>

<llo_original>
// kernel: tpu_custom_call.1
$region0: #{tpu_custom_call.1}
  #allocation0 [shape = 'u32[]', space=smem, size = 0x4, offset = 0x4, fixed_abs, tag = 'smem constant byte address 0x4 - core index']
  #allocation1 [shape = 'u32[144,128]{1,0:T(1,128)}', space=vmem, size = 0x12000, scoped, tag = 'internal scratch']
  #allocation2 [shape = 's32[1]{0}', space=sflag, size = 0x4, scoped, tag = 'scoped memory for tpu_custom_call.1']
  #allocation3 [shape = 's32[1]{0:T(128)S(6)}', space=smem, size = 0x200, scoped, tag = 'prefetched SMEM operand 0']
  #allocation4 [shape = 's32[1]{0:T(128)S(6)}', space=smem, size = 0x200, scoped, tag = 'prefetched SMEM operand 1']
  %s0 = inlined_call_operand.<no memory space> [shape: s32[1], index: 0, kind: input, shape index: {}]
  %s1 = inlined_call_operand.<no memory space> [shape: s32[1], index: 1, kind: input, shape index: {}]
  %s2 = inlined_call_operand.hbm [shape: f32[128,128], index: 2, kind: input, shape index: {}]
  %s3 = inlined_call_operand.hbm [shape: f32[128,128], index: 3, kind: input, shape index: {}]
  %s4 = inlined_call_operand.hbm [shape: f32[128,128], index: 4, kind: output, shape index: {}]
  %s5 = sld [smem:[#allocation0]]
  $region26: #{tpu_custom_call.1} parent=0
    _
  %s7 = ssub.s32 1, %s5
  %s8 = scalar_select 0, %s7, %s5
  %9 = sst [smem:[#allocation3]] %s0
  %10 = sst [smem:[#allocation4]] %s1
  $region1: #{tpu_custom_call.1} parent=0
    #allocation5 [shape = 'u8[65536]{0}', space=vmem, size = 0x10000, scoped, tag = 'input window, operand 2, single buffered']
    #allocation6 [shape = 's32[1]{0}', space=sflag, size = 0x4, scoped, tag = 'scoped memory for tpu_custom_call.1']
    #allocation7 [shape = 's32[1]{0}', space=sflag, size = 0x4, scoped, tag = 'scoped memory for tpu_custom_call.1']
    #allocation8 [shape = 'u8[65536]{0}', space=vmem, size = 0x10000, scoped, tag = 'input window, operand 3, single buffered']
    #allocation9 [shape = 's32[1]{0}', space=sflag, size = 0x4, scoped, tag = 'scoped memory for tpu_custom_call.1']
    #allocation10 [shape = 'u8[65536]{0}', space=vmem, size = 0x10000, scoped, tag = 'output window, operand 0, single buffered']
    %11 = vsyncpa [#allocation6], 0
    %12 = vsyncpa [#allocation9], 0
    %13 = vsyncpa [#allocation7], 0
    // Predicated region
    $region2: #{tpu_custom_call.1} parent=1 // pred_check
      _
    $region3: #{tpu_custom_call.1} parent=1 // pred_check_branch
      %15 = sbr.rel (0) target = $region5
    $region4: #{tpu_custom_call.1} parent=1 // pred_region
      %s16 = sld [smem:[#allocation3]]
      %s17 = smul.u32 16, %s16
      %s19 = ssub.s32 2048, 2048
      %20 = vsyncadd [#allocation6], %s19
      %s21 = smul.addr %s17, 128
      %s22 = scalar_lea.hbm %s2, %s21
      %s23 = sshll.u32 [#allocation5], 4
      %s24 = int_to_ptr.vmem [resolvable:$true] %s23
      %29 = dma.hbm_to_vmem [thread:$0]  %s22, 2048, %s24, [#allocation6], 128, 128, 8
    $region5: #{tpu_custom_call.1} parent=1 // pred_fallthru
      _
    // Predicated region
    $region6: #{tpu_custom_call.1} parent=1 // pred_check
      _
    $region7: #{tpu_custom_call.1} parent=1 // pred_check_branch
      %31 = sbr.rel (0) target = $region9
    $region8: #{tpu_custom_call.1} parent=1 // pred_region
      %s32 = sld [smem:[#allocation4]]
      %s34 = ssub.s32 2048, 2048
      %35 = vsyncadd [#allocation9], %s34
      %s36 = smul.addr %s32, 128
      %s37 = scalar_lea.hbm %s3, %s36
      %s38 = sshll.u32 [#allocation8], 4
      %s39 = int_to_ptr.vmem [resolvable:$true] %s38
      %44 = dma.hbm_to_vmem [thread:$0]  %s37, 2048, %s39, [#allocation9], 128, 128, 8
    $region9: #{tpu_custom_call.1} parent=1 // pred_fallthru
      _
    // Predicated region
    $region10: #{tpu_custom_call.1} parent=1 // pred_check
      _
    $region11: #{tpu_custom_call.1} parent=1 // pred_check_branch
      %46 = sbr.rel (0) target = $region13
    $region12: #{tpu_custom_call.1} parent=1 // pred_region
      %47 = dma.done [#allocation6], 2048
    $region13: #{tpu_custom_call.1} parent=1 // pred_fallthru
      _
    // Predicated region
    $region14: #{tpu_custom_call.1} parent=1 // pred_check
      _
    $region15: #{tpu_custom_call.1} parent=1 // pred_check_branch
      %49 = sbr.rel (0) target = $region17
    $region16: #{tpu_custom_call.1} parent=1 // pred_region
      %50 = dma.done [#allocation9], 2048
    $region17: #{tpu_custom_call.1} parent=1 // pred_fallthru
      _
    %s51 = sld [smem:[#allocation3]]
    %s52 = smul.u32 16, %s51
    %s53 = sld [smem:[#allocation4]]
    %s54 = sld [smem:[#allocation3]]
    %s55 = sld [smem:[#allocation4]]
    %s56 = smul.u32 16, %s54
    %v57 = vld [vmem:[#allocation5] sm:$0xff]
    %v58 = vld [vmem:[#allocation5 + $0x8] sm:$0xff]
    %v59 = vld [vmem:[#allocation5 + $0x10] sm:$0xff]
    %v60 = vld [vmem:[#allocation5 + $0x18] sm:$0xff]
    %v61 = vld [vmem:[#allocation5 + $0x20] sm:$0xff]
    %v62 = vld [vmem:[#allocation5 + $0x28] sm:$0xff]
    %v63 = vld [vmem:[#allocation5 + $0x30] sm:$0xff]
    %v64 = vld [vmem:[#allocation5 + $0x38] sm:$0xff]
    %v65 = vld [vmem:[#allocation5 + $0x40] sm:$0xff]
    %v66 = vld [vmem:[#allocation5 + $0x48] sm:$0xff]
    %v67 = vld [vmem:[#allocation5 + $0x50] sm:$0xff]
    %v68 = vld [vmem:[#allocation5 + $0x58] sm:$0xff]
    %v69 = vld [vmem:[#allocation5 + $0x60] sm:$0xff]
    %v70 = vld [vmem:[#allocation5 + $0x68] sm:$0xff]
    %v71 = vld [vmem:[#allocation5 + $0x70] sm:$0xff]
    %v72 = vld [vmem:[#allocation5 + $0x78] sm:$0xff]
    %v73 = vld [vmem:[#allocation8] sm:$0xff]
    %v74 = vld [vmem:[#allocation8 + $0x8] sm:$0xff]
    %v75 = vld [vmem:[#allocation8 + $0x10] sm:$0xff]
    %v76 = vld [vmem:[#allocation8 + $0x18] sm:$0xff]
    %v77 = vld [vmem:[#allocation8 + $0x20] sm:$0xff]
    %v78 = vld [vmem:[#allocation8 + $0x28] sm:$0xff]
    %v79 = vld [vmem:[#allocation8 + $0x30] sm:$0xff]
    %v80 = vld [vmem:[#allocation8 + $0x38] sm:$0xff]
    %v81 = vld [vmem:[#allocation8 + $0x40] sm:$0xff]
    %v82 = vld [vmem:[#allocation8 + $0x48] sm:$0xff]
    %v83 = vld [vmem:[#allocation8 + $0x50] sm:$0xff]
    %v84 = vld [vmem:[#allocation8 + $0x58] sm:$0xff]
    %v85 = vld [vmem:[#allocation8 + $0x60] sm:$0xff]
    %v86 = vld [vmem:[#allocation8 + $0x68] sm:$0xff]
    %v87 = vld [vmem:[#allocation8 + $0x70] sm:$0xff]
    %v88 = vld [vmem:[#allocation8 + $0x78] sm:$0xff]
    %89 = vmatprep.subr.mxu0 0.0
    %90 = vmatpush1.msra.mxu0 %v73
    %91 = vmatprep.subr.mxu0 0.0
    %92 = vmatpush1.msra.mxu0 %v74
    %93 = vmatprep.subr.mxu0 0.0
    %94 = vmatpush1.msra.mxu0 %v75
    %95 = vmatprep.subr.mxu0 0.0
    %96 = vmatpush1.msra.mxu0 %v76
    %97 = vmatprep.subr.mxu0 0.0
    %98 = vmatpush1.msra.mxu0 %v77
    %99 = vmatprep.subr.mxu0 0.0
    %100 = vmatpush1.msra.mxu0 %v78
    %101 = vmatprep.subr.mxu0 0.0
    %102 = vmatpush1.msra.mxu0 %v79
    %103 = vmatprep.subr.mxu0 0.0
    %104 = vmatpush1.msra.mxu0 %v80
    %105 = vmatprep.subr.mxu0 0.0
    %106 = vmatpush1.msra.mxu0 %v81
    %107 = vmatprep.subr.mxu0 0.0
    %108 = vmatpush1.msra.mxu0 %v82
    %109 = vmatprep.subr.mxu0 0.0
    %110 = vmatpush1.msra.mxu0 %v83
    %111 = vmatprep.subr.mxu0 0.0
    %112 = vmatpush1.msra.mxu0 %v84
    %113 = vmatprep.subr.mxu0 0.0
    %114 = vmatpush1.msra.mxu0 %v85
    %115 = vmatprep.subr.mxu0 0.0
    %116 = vmatpush1.msra.mxu0 %v86
    %117 = vmatprep.subr.mxu0 0.0
    %118 = vmatpush1.msra.mxu0 %v87
    %119 = vmatprep.subr.mxu0 0.0
    %120 = vmatpush1.msra.mxu0 %v88
    %121 = vmatprep.subr.mxu0 0.0
    %122 = vmatpush1.msra.mxu0 0.0
    %123 = vmatprep.subr.mxu0 0.0
    %124 = vmatpush1.msra.mxu0 0.0
    %125 = vmatprep.subr.mxu0 0.0
    %126 = vmatpush1.msra.mxu0 0.0
    %127 = vmatprep.subr.mxu0 0.0
    %128 = vmatpush1.msra.mxu0 0.0
    %129 = vmatprep.subr.mxu0 0.0
    %130 = vmatpush1.msra.mxu0 0.0
    %131 = vmatprep.subr.mxu0 0.0
    %132 = vmatpush1.msra.mxu0 0.0
    %133 = vmatprep.subr.mxu0 0.0
    %134 = vmatpush1.msra.mxu0 0.0
    %135 = vmatprep.subr.mxu0 0.0
    %136 = vmatpush1.msra.mxu0 0.0
    %137 = vmatprep.subr.mxu0 0.0
    %138 = vmatpush1.msra.mxu0 0.0
    %139 = vmatprep.subr.mxu0 0.0
    %140 = vmatpush1.msra.mxu0 0.0
    %141 = vmatprep.subr.mxu0 0.0
    %142 = vmatpush1.msra.mxu0 0.0
    %143 = vmatprep.subr.mxu0 0.0
    %144 = vmatpush1.msra.mxu0 0.0
    %145 = vmatprep.subr.mxu0 0.0
    %146 = vmatpush1.msra.mxu0 0.0
    %147 = vmatprep.subr.mxu0 0.0
    %148 = vmatpush1.msra.mxu0 0.0
    %149 = vmatprep.subr.mxu0 0.0
    %150 = vmatpush1.msra.mxu0 0.0
    %151 = vmatprep.subr.mxu0 0.0
    %152 = vmatpush1.msra.mxu0 0.0
    %153 = vmatprep.mubr.f32.mxu0 0.0
    %154 = vmatmul.mubr.f32.gmra.mrb[0].mxu0 %v57
    %v155 = vpop.f32.mrb[0].mxu0
    %v156 = vadd.f32 0.0, %v155
    %v157 = vpop.f32.mrb[0].mxu0
    %158 = vmatprep.mubr.f32.mxu0 0.0
    %159 = vmatmul.mubr.f32.gmra.mrb[0].mxu0 %v58
    %v160 = vpop.f32.mrb[0].mxu0
    %v161 = vadd.f32 0.0, %v160
    %v162 = vpop.f32.mrb[0].mxu0
    %163 = vmatprep.mubr.f32.mxu0 0.0
    %164 = vmatmul.mubr.f32.gmra.mrb[0].mxu0 %v59
    %v165 = vpop.f32.mrb[0].mxu0
    %v166 = vadd.f32 0.0, %v165
    %v167 = vpop.f32.mrb[0].mxu0
    %168 = vmatprep.mubr.f32.mxu0 0.0
    %169 = vmatmul.mubr.f32.gmra.mrb[0].mxu0 %v60
    %v170 = vpop.f32.mrb[0].mxu0
    %v171 = vadd.f32 0.0, %v170
    %v172 = vpop.f32.mrb[0].mxu0
    %173 = vmatprep.mubr.f32.mxu0 0.0
    %174 = vmatmul.mubr.f32.gmra.mrb[0].mxu0 %v61
    %v175 = vpop.f32.mrb[0].mxu0
    %v176 = vadd.f32 0.0, %v175
    %v177 = vpop.f32.mrb[0].mxu0
    %178 = vmatprep.mubr.f32.mxu0 0.0
    %179 = vmatmul.mubr.f32.gmra.mrb[0].mxu0 %v62
    %v180 = vpop.f32.mrb[0].mxu0
    %v181 = vadd.f32 0.0, %v180
    %v182 = vpop.f32.mrb[0].mxu0
    %183 = vmatprep.mubr.f32.mxu0 0.0
    %184 = vmatmul.mubr.f32.gmra.mrb[0].mxu0 %v63
    %v185 = vpop.f32.mrb[0].mxu0
    %v186 = vadd.f32 0.0, %v185
    %v187 = vpop.f32.mrb[0].mxu0
    %188 = vmatprep.mubr.f32.mxu0 0.0
    %189 = vmatmul.mubr.f32.gmra.mrb[0].mxu0 %v64
    %v190 = vpop.f32.mrb[0].mxu0
    %v191 = vadd.f32 0.0, %v190
    %v192 = vpop.f32.mrb[0].mxu0
    %193 = vmatprep.mubr.f32.mxu0 0.0
    %194 = vmatmul.mubr.f32.gmra.mrb[0].mxu0 %v65
    %v195 = vpop.f32.mrb[0].mxu0
    %v196 = vadd.f32 0.0, %v195
    %v197 = vpop.f32.mrb[0].mxu0
    %198 = vmatprep.mubr.f32.mxu0 0.0
    %199 = vmatmul.mubr.f32.gmra.mrb[0].mxu0 %v66
    %v200 = vpop.f32.mrb[0].mxu0
    %v201 = vadd.f32 0.0, %v200
    %v202 = vpop.f32.mrb[0].mxu0
    %203 = vmatprep.mubr.f32.mxu0 0.0
    %204 = vmatmul.mubr.f32.gmra.mrb[0].mxu0 %v67
    %v205 = vpop.f32.mrb[0].mxu0
    %v206 = vadd.f32 0.0, %v205
    %v207 = vpop.f32.mrb[0].mxu0
    %208 = vmatprep.mubr.f32.mxu0 0.0
    %209 = vmatmul.mubr.f32.gmra.mrb[0].mxu0 %v68
    %v210 = vpop.f32.mrb[0].mxu0
    %v211 = vadd.f32 0.0, %v210
    %v212 = vpop.f32.mrb[0].mxu0
    %213 = vmatprep.mubr.f32.mxu0 0.0
    %214 = vmatmul.mubr.f32.gmra.mrb[0].mxu0 %v69
    %v215 = vpop.f32.mrb[0].mxu0
    %v216 = vadd.f32 0.0, %v215
    %v217 = vpop.f32.mrb[0].mxu0
    %218 = vmatprep.mubr.f32.mxu0 0.0
    %219 = vmatmul.mubr.f32.gmra.mrb[0].mxu0 %v70
    %v220 = vpop.f32.mrb[0].mxu0
    %v221 = vadd.f32 0.0, %v220
    %v222 = vpop.f32.mrb[0].mxu0
    %223 = vmatprep.mubr.f32.mxu0 0.0
    %224 = vmatmul.mubr.f32.gmra.mrb[0].mxu0 %v71
    %v225 = vpop.f32.mrb[0].mxu0
    %v226 = vadd.f32 0.0, %v225
    %v227 = vpop.f32.mrb[0].mxu0
    %228 = vmatprep.mubr.f32.mxu0 0.0
    %229 = vmatmul.mubr.f32.gmra.mrb[0].mxu0 %v72
    %v230 = vpop.f32.mrb[0].mxu0
    %v231 = vadd.f32 0.0, %v230
    %v232 = vpop.f32.mrb[0].mxu0
    %233 = vdwg.mxu0
    %v234 = vxor.u32 %v156, 2147483648
    %v235 = vxor.u32 %v161, 2147483648
    %v236 = vxor.u32 %v166, 2147483648
    %v237 = vxor.u32 %v171, 2147483648
    %v238 = vxor.u32 %v176, 2147483648
    %v239 = vxor.u32 %v181, 2147483648
    %v240 = vxor.u32 %v186, 2147483648
    %v241 = vxor.u32 %v191, 2147483648
    %v242 = vxor.u32 %v196, 2147483648
    %v243 = vxor.u32 %v201, 2147483648
    %v244 = vxor.u32 %v206, 2147483648
    %v245 = vxor.u32 %v211, 2147483648
    %v246 = vxor.u32 %v216, 2147483648
    %v247 = vxor.u32 %v221, 2147483648
    %v248 = vxor.u32 %v226, 2147483648
    %v249 = vxor.u32 %v231, 2147483648
    %v250 = vmul.f32 %v234, 1.442695
    %v251 = vpow.pop %v250
    %v252 = vmul.f32 %v235, 1.442695
    %v253 = vpow.pop %v252
    %v254 = vmul.f32 %v236, 1.442695
    %v255 = vpow.pop %v254
    %v256 = vmul.f32 %v237, 1.442695
    %v257 = vpow.pop %v256
    %v258 = vmul.f32 %v238, 1.442695
    %v259 = vpow.pop %v258
    %v260 = vmul.f32 %v239, 1.442695
    %v261 = vpow.pop %v260
    %v262 = vmul.f32 %v240, 1.442695
    %v263 = vpow.pop %v262
    %v264 = vmul.f32 %v241, 1.442695
    %v265 = vpow.pop %v264
    %v266 = vmul.f32 %v242, 1.442695
    %v267 = vpow.pop %v266
    %v268 = vmul.f32 %v243, 1.442695
    %v269 = vpow.pop %v268
    %v270 = vmul.f32 %v244, 1.442695
    %v271 = vpow.pop %v270
    %v272 = vmul.f32 %v245, 1.442695
    %v273 = vpow.pop %v272
    %v274 = vmul.f32 %v246, 1.442695
    %v275 = vpow.pop %v274
    %v276 = vmul.f32 %v247, 1.442695
    %v277 = vpow.pop %v276
    %v278 = vmul.f32 %v248, 1.442695
    %v279 = vpow.pop %v278
    %v280 = vmul.f32 %v249, 1.442695
    %v281 = vpow.pop %v280
    %v282 = vadd.f32 %v251, 1.0
    %v283 = vadd.f32 %v253, 1.0
    %v284 = vadd.f32 %v255, 1.0
    %v285 = vadd.f32 %v257, 1.0
    %v286 = vadd.f32 %v259, 1.0
    %v287 = vadd.f32 %v261, 1.0
    %v288 = vadd.f32 %v263, 1.0
    %v289 = vadd.f32 %v265, 1.0
    %v290 = vadd.f32 %v267, 1.0
    %v291 = vadd.f32 %v269, 1.0
    %v292 = vadd.f32 %v271, 1.0
    %v293 = vadd.f32 %v273, 1.0
    %v294 = vadd.f32 %v275, 1.0
    %v295 = vadd.f32 %v277, 1.0
    %v296 = vadd.f32 %v279, 1.0
    %v297 = vadd.f32 %v281, 1.0
    %v298 = vrcp.pop %v282
    %v299 = vmul.f32 1.0, %v298
    %v300 = vrcp.pop %v283
    %v301 = vmul.f32 1.0, %v300
    %v302 = vrcp.pop %v284
    %v303 = vmul.f32 1.0, %v302
    %v304 = vrcp.pop %v285
    %v305 = vmul.f32 1.0, %v304
    %v306 = vrcp.pop %v286
    %v307 = vmul.f32 1.0, %v306
    %v308 = vrcp.pop %v287
    %v309 = vmul.f32 1.0, %v308
    %v310 = vrcp.pop %v288
    %v311 = vmul.f32 1.0, %v310
    %v312 = vrcp.pop %v289
    %v313 = vmul.f32 1.0, %v312
    %v314 = vrcp.pop %v290
    %v315 = vmul.f32 1.0, %v314
    %v316 = vrcp.pop %v291
    %v317 = vmul.f32 1.0, %v316
    %v318 = vrcp.pop %v292
    %v319 = vmul.f32 1.0, %v318
    %v320 = vrcp.pop %v293
    %v321 = vmul.f32 1.0, %v320
    %v322 = vrcp.pop %v294
    %v323 = vmul.f32 1.0, %v322
    %v324 = vrcp.pop %v295
    %v325 = vmul.f32 1.0, %v324
    %v326 = vrcp.pop %v296
    %v327 = vmul.f32 1.0, %v326
    %v328 = vrcp.pop %v297
    %v329 = vmul.f32 1.0, %v328
    %330 = vst [vmem:[#allocation10] sm:$0xff] %v299
    %331 = vst [vmem:[#allocation10 + $0x8] sm:$0xff] %v301
    %332 = vst [vmem:[#allocation10 + $0x10] sm:$0xff] %v303
    %333 = vst [vmem:[#allocation10 + $0x18] sm:$0xff] %v305
    %334 = vst [vmem:[#allocation10 + $0x20] sm:$0xff] %v307
    %335 = vst [vmem:[#allocation10 + $0x28] sm:$0xff] %v309
    %336 = vst [vmem:[#allocation10 + $0x30] sm:$0xff] %v311
    %337 = vst [vmem:[#allocation10 + $0x38] sm:$0xff] %v313
    %338 = vst [vmem:[#allocation10 + $0x40] sm:$0xff] %v315
    %339 = vst [vmem:[#allocation10 + $0x48] sm:$0xff] %v317
    %340 = vst [vmem:[#allocation10 + $0x50] sm:$0xff] %v319
    %341 = vst [vmem:[#allocation10 + $0x58] sm:$0xff] %v321
    %342 = vst [vmem:[#allocation10 + $0x60] sm:$0xff] %v323
    %343 = vst [vmem:[#allocation10 + $0x68] sm:$0xff] %v325
    %344 = vst [vmem:[#allocation10 + $0x70] sm:$0xff] %v327
    %345 = vst [vmem:[#allocation10 + $0x78] sm:$0xff] %v329
    // Predicated region
    $region18: #{tpu_custom_call.1} parent=1 // pred_check
      _
    $region19: #{tpu_custom_call.1} parent=1 // pred_check_branch
      %347 = sbr.rel (0) target = $region21
    $region20: #{tpu_custom_call.1} parent=1 // pred_region
      %s348 = sld [smem:[#allocation3]]
      %s349 = sld [smem:[#allocation4]]
      %s350 = smul.u32 16, %s348
      %s352 = ssub.s32 2048, 2048
      %353 = vsyncadd [#allocation7], %s352
      %s354 = sadd.s32 %s349, %s350
      %s355 = smul.addr %s354, 128
      %s356 = scalar_lea.hbm %s4, %s355
      %s357 = sshll.u32 [#allocation10], 4
      %s358 = int_to_ptr.vmem [resolvable:$true] %s357
      %363 = dma.vmem_to_hbm [thread:$0]  %s358, 2048, %s356, [#allocation7], 128, 128, 8
    $region21: #{tpu_custom_call.1} parent=1 // pred_fallthru
      _
    // Predicated region
    $region22: #{tpu_custom_call.1} parent=1 // pred_check
      _
    $region23: #{tpu_custom_call.1} parent=1 // pred_check_branch
      %365 = sbr.rel (0) target = $region25
    $region24: #{tpu_custom_call.1} parent=1 // pred_region
      %366 = dma.done [#allocation7], 2048
    $region25: #{tpu_custom_call.1} parent=1 // pred_fallthru
      _
    %367 = vsyncpa [#allocation6], 1
    %368 = vsyncpa [#allocation9], 1
    %369 = vsyncpa [#allocation7], 1

</llo_original>
